<compile_context>
chip_gen: v6e
topology: v6e:2x2x1
jax: 0.10.0
libtpu: 0.0.40
codegen_flags: <defaults>
</compile_context>

<pallas_src>
import jax
import jax.numpy as jnp
from jax.experimental import pallas as pl
from jax.experimental.pallas import tpu as pltpu


# ---------------------------------------------------------------------------
# Kernels
# ---------------------------------------------------------------------------
def _alias_identity_kernel(x_ref, o_ref):
    # Output is aliased to the input (same HBM buffer): nothing to move.
    # `touch` pins a fake read/write dependency so the aliased output is
    # considered produced by this kernel.
    del x_ref
    pltpu.touch(o_ref)


def _copy_kernel(x_ref, o_ref):
    # Reference forward is identity (NOT max(x, 0)).
    o_ref[...] = x_ref[...]


# ---------------------------------------------------------------------------
# Helpers
# ---------------------------------------------------------------------------
def _round_up(v, m):
    return ((v + m - 1) // m) * m


def _pick_lanes(total):
    """Largest lane width in {1024, 512, 256, 128} dividing `total`,
    preferring factorings that leave >= 8 rows (full (8,128) vreg tiles)."""
    candidates = [l for l in (1024, 512, 256, 128) if total % l == 0]
    if not candidates:
        return None
    for lanes in candidates:           # descending
        if total // lanes >= 8:
            return lanes
    return candidates[0]


def _factor_2d(shape, total):
    """Factor the flat element count into a lane-dense (rows, width) slab."""
    lanes = _pick_lanes(total)
    if lanes is not None:
        return total // lanes, lanes
    # Element count not divisible by 128: keep the original trailing dim as
    # the (full-extent, hence always-legal) lane width.
    # TODO(synk): re-factor to a padded 128-lane slab when shape[-1] < 128 to
    # avoid masked vst.msk partial stores.
    last = shape[-1] if len(shape) else 1
    return total // last, last


# ---------------------------------------------------------------------------
# Paths
# ---------------------------------------------------------------------------
def _alias_identity(x):
    """Zero-DMA identity: output aliases the input buffer."""
    return pl.pallas_call(
        _alias_identity_kernel,
        out_shape=jax.ShapeDtypeStruct(x.shape, x.dtype),
        in_specs=[pl.BlockSpec(memory_space=pl.ANY)],
        out_specs=pl.BlockSpec(memory_space=pl.ANY),
        input_output_aliases={0: 0},
        cost_estimate=pl.CostEstimate(flops=0, transcendentals=0, bytes_accessed=0),
    )(x)


def _tiled_copy(x):
    """Tiled, lane-dense, pipelined HBM->VMEM->HBM copy (identity)."""
    orig_shape = x.shape
    total = int(x.size)
    itemsize = jnp.dtype(x.dtype).itemsize
    rows, width = _factor_2d(orig_shape, total)
    x2d = x.reshape(rows, width)

    bytes_per_row = max(1, width * itemsize)
    if rows < 16:
        # Tiny array: single full-extent block (always a legal block shape).
        block_rows = rows
    else:
        # ~4 MiB per tile; with in+out double buffered that is ~16 MiB VMEM,
        # safe on v5e/v6e defaults and well under v7x's 64 MiB physical VMEM.
        block_rows = max(8, min(rows, (4 << 20) // bytes_per_row))
        block_rows = (block_rows // 8) * 8
        # v7x megacore: guarantee >= 2 grid steps so both TensorCores copy.
        if pl.cdiv(rows, block_rows) < 2:
            block_rows = max(8, _round_up(pl.cdiv(rows, 2), 8))

    grid = (pl.cdiv(rows, block_rows),)
    tile_bytes = block_rows * bytes_per_row
    # Cover 4 buffers (in + out, double buffered) with ~50% headroom.
    vmem_limit = int(min(96 << 20, max(16 << 20, 6 * tile_bytes)))

    out2d = pl.pallas_call(
        _copy_kernel,
        out_shape=jax.ShapeDtypeStruct((rows, width), x.dtype),
        grid=grid,
        in_specs=[pl.BlockSpec((block_rows, width), lambda i: (i, 0))],
        out_specs=pl.BlockSpec((block_rows, width), lambda i: (i, 0)),
        compiler_params=pltpu.CompilerParams(
            dimension_semantics=("parallel",),
            vmem_limit_bytes=vmem_limit,
        ),
        cost_estimate=pl.CostEstimate(
            flops=0, transcendentals=0, bytes_accessed=2 * total * itemsize
        ),
    )(x2d)
    return out2d.reshape(orig_shape)


def relu_forward(x):
    """Reproduces ReLU.forward(x) -> x (identity), same shape & dtype."""
    # TODO(synk): the Python-side `print('call ReLU.forward')` side effect has
    # no kernel equivalent.
    if x.size == 0:
        return x
    try:
        # Highest-value path per perf review: no copy at all (aliased output).
        return _alias_identity(x)
    except Exception:
        # Conservative fallback: tiled, lane-dense bandwidth copy (~85-90% of
        # HBM roofline) if the aliased no-op kernel cannot be lowered here.
        return _tiled_copy(x)


if __name__ == "__main__":
    key = jax.random.PRNGKey(0)
    x = jax.random.normal(key, (2, 4, 16, 16), dtype=jnp.float32)  # NCHW

    # Primary (zero-copy aliased) path.
    y = relu_forward(x)
    jax.block_until_ready(y)
    assert y.shape == x.shape and y.dtype == x.dtype
    assert bool(jnp.all(y == x))  # forward is identity in the reference module

    # Also exercise the tiled copy path so both code paths are validated.
    y2 = _tiled_copy(x)
    jax.block_until_ready(y2)
    assert y2.shape == x.shape and y2.dtype == x.dtype
    assert bool(jnp.all(y2 == x))

    print("KERNEL_OK")
</pallas_src>

<mosaic_0001>
module attributes {stable_mosaic.version = 11 : i64} {
  func.func @_alias_identity_kernel(%arg0: memref<2x4x16x16xf32, #tpu.memory_space<any>>, %arg1: memref<2x4x16x16xf32, #tpu.memory_space<any>>) attributes {dimension_semantics = [], scalar_prefetch = 0 : i64, scratch_operands = 0 : i64, tpu.core_type = #tpu.core_type<tc>} {
    return
  }
}

module attributes {stable_mosaic.version = 11 : i64} {
  func.func @_copy_kernel(%arg0: i32, %arg1: memref<8x256xf32, #tpu.memory_space<vmem>>, %arg2: memref<8x256xf32, #tpu.memory_space<vmem>>) attributes {dimension_semantics = [#tpu.dimension_semantics<parallel>], iteration_bounds = array<i64: 1>, scalar_prefetch = 0 : i64, scratch_operands = 0 : i64, tpu.core_type = #tpu.core_type<tc>, window_params = [{transform_indices = @transform_0, window_bounds = array<i64: 8, 256>}, {transform_indices = @transform_1, window_bounds = array<i64: 8, 256>}]} {
    %c0 = arith.constant 0 : index
    %c0_0 = arith.constant 0 : index
    %0 = vector.load %arg1[%c0, %c0_0] : memref<8x256xf32, #tpu.memory_space<vmem>>, vector<8x256xf32>
    %c0_1 = arith.constant 0 : index
    %c0_2 = arith.constant 0 : index
    %1 = vector.load %arg2[%c0_1, %c0_2] : memref<8x256xf32, #tpu.memory_space<vmem>>, vector<8x256xf32>
    tpu.vector_store %arg2[%c0_1, %c0_2], %0 {strides = array<i32>} : memref<8x256xf32, #tpu.memory_space<vmem>>, vector<8x256xf32>,
    return
  }
  func.func @transform_0(%arg0: i32) -> (i32, i32) {
    %c0_i32 = arith.constant 0 : i32
    %c0_i32_0 = arith.constant 0 : i32
    return %arg0, %c0_i32 : i32, i32
  }
  func.func @transform_1(%arg0: i32) -> (i32, i32) {
    %c0_i32 = arith.constant 0 : i32
    %c0_i32_0 = arith.constant 0 : i32
    return %arg0, %c0_i32 : i32, i32
  }
}

</mosaic_0001>

<llo_original>
// kernel: tpu_custom_call.1
$region0: #{tpu_custom_call.1}
  #allocation0 [shape = 'u32[]', space=smem, size = 0x4, offset = 0x4, fixed_abs, tag = 'smem constant byte address 0x4 - core index']
  #allocation1 [shape = 'u32[144,128]{1,0:T(1,128)}', space=vmem, size = 0x12000, scoped, tag = 'internal scratch']
  %s0 = inlined_call_operand.hbm [shape: f32[2,4,16,16], index: 0, kind: input, shape index: {}, may-alias: {0,1}]
  %s1 = inlined_call_operand.hbm [shape: f32[2,4,16,16], index: 1, kind: output, shape index: {}, may-alias: {0,1}]
  %s2 = sld [smem:[#allocation0]]
  $region2: #{tpu_custom_call.1} parent=0
    _
  %s4 = ssub.s32 1, %s2
  %s5 = scalar_select 0, %s4, %s2

// kernel: tpu_custom_call.1
$region0: #{tpu_custom_call.1}
  #allocation0 [shape = 'u32[]', space=smem, size = 0x4, offset = 0x4, fixed_abs, tag = 'smem constant byte address 0x4 - core index']
  #allocation1 [shape = 'u32[144,128]{1,0:T(1,128)}', space=vmem, size = 0x12000, scoped, tag = 'internal scratch']
  %s0 = inlined_call_operand.hbm [shape: f32[8,256], index: 0, kind: input, shape index: {}]
  %s1 = inlined_call_operand.hbm [shape: f32[8,256], index: 1, kind: output, shape index: {}]
  %s2 = sld [smem:[#allocation0]]
  $region18: #{tpu_custom_call.1} parent=0
    _
  %s4 = ssub.s32 1, %s2
  %s5 = scalar_select 0, %s4, %s2
  $region1: #{tpu_custom_call.1} parent=0
    #allocation2 [shape = 'u8[8192]{0}', space=vmem, size = 0x2000, scoped, tag = 'input window, operand 0, single buffered']
    #allocation3 [shape = 's32[1]{0}', space=sflag, size = 0x4, scoped, tag = 'scoped memory for tpu_custom_call.1']
    #allocation4 [shape = 's32[1]{0}', space=sflag, size = 0x4, scoped, tag = 'scoped memory for tpu_custom_call.1']
    #allocation5 [shape = 'u8[8192]{0}', space=vmem, size = 0x2000, scoped, tag = 'output window, operand 0, single buffered']
    %6 = vsyncpa [#allocation3], 0
    %7 = vsyncpa [#allocation4], 0
    // Predicated region
    $region2: #{tpu_custom_call.1} parent=1 // pred_check
      _
    $region3: #{tpu_custom_call.1} parent=1 // pred_check_branch
      %9 = sbr.rel (0) target = $region5
    $region4: #{tpu_custom_call.1} parent=1 // pred_region
      %s11 = ssub.s32 256, 256
      %12 = vsyncadd [#allocation3], %s11
      %s14 = sshll.u32 [#allocation2], 4
      %s15 = int_to_ptr.vmem [resolvable:$true] %s14
      %17 = dma.hbm_to_vmem [thread:$0]  %s0, 256, %s15, [#allocation3]
    $region5: #{tpu_custom_call.1} parent=1 // pred_fallthru
      _
    // Predicated region
    $region6: #{tpu_custom_call.1} parent=1 // pred_check
      _
    $region7: #{tpu_custom_call.1} parent=1 // pred_check_branch
      %19 = sbr.rel (0) target = $region9
    $region8: #{tpu_custom_call.1} parent=1 // pred_region
      %20 = dma.done [#allocation3], 256
    $region9: #{tpu_custom_call.1} parent=1 // pred_fallthru
      _
    %v21 = vld [vmem:[#allocation2] sm:$0xff]
    %v22 = vld [vmem:[#allocation2 + $0x8] sm:$0xff]
    %23 = vst [vmem:[#allocation5] sm:$0xff] %v21
    %24 = vst [vmem:[#allocation5 + $0x8] sm:$0xff] %v22
    // Predicated region
    $region10: #{tpu_custom_call.1} parent=1 // pred_check
      _
    $region11: #{tpu_custom_call.1} parent=1 // pred_check_branch
      %26 = sbr.rel (0) target = $region13
    $region12: #{tpu_custom_call.1} parent=1 // pred_region
      %s28 = ssub.s32 256, 256
      %29 = vsyncadd [#allocation4], %s28
      %s31 = sshll.u32 [#allocation5], 4
      %s32 = int_to_ptr.vmem [resolvable:$true] %s31
      %34 = dma.vmem_to_hbm [thread:$0]  %s32, 256, %s1, [#allocation4]
    $region13: #{tpu_custom_call.1} parent=1 // pred_fallthru
      _
    // Predicated region
    $region14: #{tpu_custom_call.1} parent=1 // pred_check
      _
    $region15: #{tpu_custom_call.1} parent=1 // pred_check_branch
      %36 = sbr.rel (0) target = $region17
    $region16: #{tpu_custom_call.1} parent=1 // pred_region
      %37 = dma.done [#allocation4], 256
    $region17: #{tpu_custom_call.1} parent=1 // pred_fallthru
      _
    %38 = vsyncpa [#allocation3], 1
    %39 = vsyncpa [#allocation4], 1

</llo_original>
